<compile_context>
chip_gen: v6e
topology: v6e:2x2x1
jax: 0.10.0
libtpu: 0.0.40
codegen_flags: <defaults>
</compile_context>

<pallas_src>
import functools

import jax
import jax.numpy as jnp
from jax.experimental import pallas as pl
from jax.experimental.pallas import tpu as pltpu


def _round_up(x, m):
    return ((x + m - 1) // m) * m


def _leaky_relu(x, slope=0.01):
    # max(x, slope*x) == LeakyReLU for slope in (0, 1)
    return jnp.maximum(x, slope * x)


# ---------------------------------------------------------------------------
# Packed weight layout (single (R, 128) f32 buffer, built once in the wrapper)
#   rows [0, state_dim)           cols [0, 64)   : W1           (state_dim, 64)
#   rows [state_dim, D_in)        cols [64, 96)  : Wa           (action_dim, 32)
#   rows [D_in, D_in+64)          cols [0, 32)   : W2           (64, 32)
#   row  D_in+64                  cols [0, 96)   : [b1 | ba]    (96,)
#   row  D_in+65                  cols [0, 32)   : b2           (32,)
#   row  D_in+66                  cols [0, 32)   : Wf[:32, 0]   (state half)
#   row  D_in+67                  cols [0, 32)   : Wf[32:, 0]   (action half)
#   row  D_in+68                  col  0         : bf
# ---------------------------------------------------------------------------
def _pack_weights(params, state_dim, action_dim):
    w1, b1, w2, b2, wa, ba, wf, bf = params
    d_in = state_dim + action_dim
    rows = _round_up(d_in + 64 + 5, 8)
    w = jnp.zeros((rows, 128), jnp.float32)
    w = w.at[0:state_dim, 0:64].set(w1.astype(jnp.float32))
    w = w.at[state_dim:d_in, 64:96].set(wa.astype(jnp.float32))
    w = w.at[d_in:d_in + 64, 0:32].set(w2.astype(jnp.float32))
    w = w.at[d_in + 64, 0:64].set(b1.reshape(-1).astype(jnp.float32))
    w = w.at[d_in + 64, 64:96].set(ba.reshape(-1).astype(jnp.float32))
    w = w.at[d_in + 65, 0:32].set(b2.reshape(-1).astype(jnp.float32))
    w = w.at[d_in + 66, 0:32].set(wf[0:32, 0].astype(jnp.float32))
    w = w.at[d_in + 67, 0:32].set(wf[32:64, 0].astype(jnp.float32))
    w = w.at[d_in + 68, 0].set(bf.reshape(-1)[0].astype(jnp.float32))
    return w


def critic_ddpg_kernel(sa_ref, w_ref, o_ref, *, state_dim, action_dim):
    d_in = state_dim + action_dim

    sa = sa_ref[...]                                    # (TB, D_in)  packed [state|action]

    # Static slices into the VMEM-resident packed weight buffer.
    w_in = w_ref[0:d_in, 0:96]                          # block-diag [W1|0 ; 0|Wa]
    w2   = w_ref[d_in:d_in + 64, 0:32]                  # (64, 32)
    b_in = w_ref[d_in + 64:d_in + 65, 0:96]             # (1, 96)  = [b1 | ba]
    b2   = w_ref[d_in + 65:d_in + 66, 0:32]             # (1, 32)
    wf_s = w_ref[d_in + 66:d_in + 67, 0:32]             # (1, 32)  Wf state half
    wf_a = w_ref[d_in + 67:d_in + 68, 0:32]             # (1, 32)  Wf action half
    bf   = w_ref[d_in + 68:d_in + 69, 0:1]              # (1, 1)

    # One MXU matmul yields both branches' first layers (zeros in the
    # off-diagonal blocks make it exactly state@W1 and action@Wa).
    h = jnp.dot(sa, w_in, preferred_element_type=jnp.float32) + b_in
    h = _leaky_relu(h)                                  # (TB, 96)
    h1 = h[:, 0:64]                                     # state hidden
    ae = h[:, 64:96]                                    # action embed (already activated)

    se = _leaky_relu(jnp.dot(h1, w2, preferred_element_type=jnp.float32) + b2)  # (TB, 32)

    # Final Linear(64, 1) with Wf split -> VPU multiply + XLU lane reduce
    # (no concat, no 1-column MXU matmul).
    o_ref[...] = jnp.sum(se * wf_s + ae * wf_a, axis=-1, keepdims=True) + bf


def critic_ddpg_forward(state, action, params, *, tile_b=1024):
    B, state_dim = state.shape
    action_dim = action.shape[1]
    d_in = state_dim + action_dim

    # Batch tile: multiple of 8 sublanes; sized well inside v7x's 64 MiB VMEM
    # (per tile: ~TB*512B lane-padded input x 2 buffers + ~50 KB weights).
    tb = min(tile_b, _round_up(B, 8))
    b_pad = _round_up(B, tb)

    # Pack [state | action] into one slab; pad batch rows with zeros.
    sa = jnp.concatenate([state.astype(jnp.float32),
                          action.astype(jnp.float32)], axis=1)
    if b_pad != B:
        sa = jnp.pad(sa, ((0, b_pad - B), (0, 0)))

    w_pack = _pack_weights(params, state_dim, action_dim)
    rows = w_pack.shape[0]

    kernel = functools.partial(critic_ddpg_kernel,
                               state_dim=state_dim, action_dim=action_dim)

    out = pl.pallas_call(
        kernel,
        out_shape=jax.ShapeDtypeStruct((b_pad, 1), jnp.float32),
        grid=(b_pad // tb,),
        in_specs=[
            pl.BlockSpec((tb, d_in), lambda i: (i, 0)),       # streamed batch tiles
            pl.BlockSpec((rows, 128), lambda i: (0, 0)),      # weights stay resident
        ],
        out_specs=pl.BlockSpec((tb, 1), lambda i: (i, 0)),
        compiler_params=pltpu.CompilerParams(
            dimension_semantics=("parallel",),                # shard batch over TCs (v7x)
        ),
    )(sa, w_pack)

    return out[:B]   # (B, 1); PyTorch squeezes to (1,) only when B == 1.


def init_params(key, state_dim, action_dim):
    """Deterministic synthetic init (PyTorch-Linear-like uniform fan-in scaling)."""
    def linear(key, fan_in, fan_out):
        k_w, k_b = jax.random.split(key)
        bound = 1.0 / jnp.sqrt(jnp.float32(fan_in))
        w = jax.random.uniform(k_w, (fan_in, fan_out), jnp.float32, -bound, bound)
        b = jax.random.uniform(k_b, (1, fan_out), jnp.float32, -bound, bound)
        return w, b

    k1, k2, k3, k4 = jax.random.split(key, 4)
    w1, b1 = linear(k1, state_dim, 64)
    w2, b2 = linear(k2, 64, 32)
    wa, ba = linear(k3, action_dim, 32)
    wf, bf = linear(k4, 64, 1)
    return (w1, b1, w2, b2, wa, ba, wf, bf)


def reference_forward(state, action, params):
    w1, b1, w2, b2, wa, ba, wf, bf = params
    se = _leaky_relu(_leaky_relu(state @ w1 + b1) @ w2 + b2)
    ae = _leaky_relu(action @ wa + ba)
    x = jnp.concatenate([se, ae], axis=1)
    return x @ wf + bf


if __name__ == "__main__":
    B, state_dim, action_dim = 2, 8, 4

    key = jax.random.PRNGKey(0)
    k_s, k_a, k_p = jax.random.split(key, 3)
    state = jax.random.normal(k_s, (B, state_dim), jnp.float32)
    action = jax.random.normal(k_a, (B, action_dim), jnp.float32)
    params = init_params(k_p, state_dim, action_dim)

    out = critic_ddpg_forward(state, action, params)
    out = jax.block_until_ready(out)

    ref = reference_forward(state, action, params)
    assert out.shape == (B, 1), out.shape
    assert jnp.allclose(out, ref, atol=1e-5, rtol=1e-5), (out, ref)

    print("KERNEL_OK")
</pallas_src>

<mosaic_0001>
module attributes {stable_mosaic.version = 11 : i64} {
  func.func @critic_ddpg_kernel(%arg0: i32, %arg1: memref<8x12xf32, #tpu.memory_space<vmem>>, %arg2: memref<88x128xf32, #tpu.memory_space<vmem>>, %arg3: memref<8x1xf32, #tpu.memory_space<vmem>>) attributes {dimension_semantics = [#tpu.dimension_semantics<parallel>], iteration_bounds = array<i64: 1>, scalar_prefetch = 0 : i64, scratch_operands = 0 : i64, tpu.core_type = #tpu.core_type<tc>, window_params = [{transform_indices = @transform_0, window_bounds = array<i64: 8, 12>}, {pipeline_mode = #tpu.pipeline_mode<synchronous>, transform_indices = @transform_1, window_bounds = array<i64: 88, 128>}, {transform_indices = @transform_2, window_bounds = array<i64: 8, 1>}]} {
    %c0 = arith.constant 0 : index
    %c0_0 = arith.constant 0 : index
    %0 = vector.load %arg1[%c0, %c0_0] : memref<8x12xf32, #tpu.memory_space<vmem>>, vector<8x12xf32>
    %c0_1 = arith.constant 0 : index
    %c0_2 = arith.constant 0 : index
    %1 = vector.load %arg2[%c0_1, %c0_2] : memref<88x128xf32, #tpu.memory_space<vmem>>, vector<12x96xf32>
    %c12 = arith.constant 12 : index
    %c0_3 = arith.constant 0 : index
    %2 = vector.load %arg2[%c12, %c0_3] : memref<88x128xf32, #tpu.memory_space<vmem>>, vector<64x32xf32>
    %c76 = arith.constant 76 : index
    %c0_4 = arith.constant 0 : index
    %3 = vector.load %arg2[%c76, %c0_4] : memref<88x128xf32, #tpu.memory_space<vmem>>, vector<1x96xf32>
    %c77 = arith.constant 77 : index
    %c0_5 = arith.constant 0 : index
    %4 = vector.load %arg2[%c77, %c0_5] : memref<88x128xf32, #tpu.memory_space<vmem>>, vector<1x32xf32>
    %c78 = arith.constant 78 : index
    %c0_6 = arith.constant 0 : index
    %5 = vector.load %arg2[%c78, %c0_6] : memref<88x128xf32, #tpu.memory_space<vmem>>, vector<1x32xf32>
    %c79 = arith.constant 79 : index
    %c0_7 = arith.constant 0 : index
    %6 = vector.load %arg2[%c79, %c0_7] : memref<88x128xf32, #tpu.memory_space<vmem>>, vector<1x32xf32>
    %c80 = arith.constant 80 : index
    %c0_8 = arith.constant 0 : index
    %7 = vector.load %arg2[%c80, %c0_8] : memref<88x128xf32, #tpu.memory_space<vmem>>, vector<1x1xf32>
    %cst = arith.constant dense<0.000000e+00> : vector<8x96xf32>
    %8 = tpu.matmul %0, %1, %cst {dimension_numbers = #tpu.dot_dimension_numbers<[1], [0], [0], [1], [0, 0, 1, 1], [], []>} : vector<8x12xf32>, vector<12x96xf32>, vector<8x96xf32> -> vector<8x96xf32>
    %9 = vector.broadcast %3 : vector<1x96xf32> to vector<8x96xf32>
    %10 = arith.addf %8, %9 : vector<8x96xf32>
    %cst_9 = arith.constant 0.00999999977 : f32
    %11 = vector.broadcast %cst_9 : f32 to vector<8x96xf32>
    %12 = arith.mulf %11, %10 : vector<8x96xf32>
    %13 = arith.maximumf %10, %12 : vector<8x96xf32>
    %14 = vector.extract_strided_slice %13 {offsets = [0, 0], sizes = [8, 64], strides = [1, 1]} : vector<8x96xf32> to vector<8x64xf32>
    %15 = vector.extract_strided_slice %13 {offsets = [0, 64], sizes = [8, 32], strides = [1, 1]} : vector<8x96xf32> to vector<8x32xf32>
    %cst_10 = arith.constant dense<0.000000e+00> : vector<8x32xf32>
    %16 = tpu.matmul %14, %2, %cst_10 {dimension_numbers = #tpu.dot_dimension_numbers<[1], [0], [0], [1], [0, 0, 1, 1], [], []>} : vector<8x64xf32>, vector<64x32xf32>, vector<8x32xf32> -> vector<8x32xf32>
    %17 = vector.broadcast %4 : vector<1x32xf32> to vector<8x32xf32>
    %18 = arith.addf %16, %17 : vector<8x32xf32>
    %cst_11 = arith.constant 0.00999999977 : f32
    %19 = vector.broadcast %cst_11 : f32 to vector<8x32xf32>
    %20 = arith.mulf %19, %18 : vector<8x32xf32>
    %21 = arith.maximumf %18, %20 : vector<8x32xf32>
    %22 = vector.broadcast %5 : vector<1x32xf32> to vector<8x32xf32>
    %23 = arith.mulf %21, %22 : vector<8x32xf32>
    %24 = vector.broadcast %6 : vector<1x32xf32> to vector<8x32xf32>
    %25 = arith.mulf %15, %24 : vector<8x32xf32>
    %26 = arith.addf %23, %25 : vector<8x32xf32>
    %cst_12 = arith.constant dense<0.000000e+00> : vector<8xf32>
    %27 = vector.multi_reduction <add>, %26, %cst_12 [1] : vector<8x32xf32> to vector<8xf32>
    %28 = vector.shape_cast %27 : vector<8xf32> to vector<8x1xf32>
    %29 = vector.broadcast %7 : vector<1x1xf32> to vector<8x1xf32>
    %30 = arith.addf %28, %29 : vector<8x1xf32>
    %c0_13 = arith.constant 0 : index
    %c0_14 = arith.constant 0 : index
    %31 = vector.load %arg3[%c0_13, %c0_14] : memref<8x1xf32, #tpu.memory_space<vmem>>, vector<8x1xf32>
    tpu.vector_store %arg3[%c0_13, %c0_14], %30 {strides = array<i32>} : memref<8x1xf32, #tpu.memory_space<vmem>>, vector<8x1xf32>,
    return
  }
  func.func @transform_0(%arg0: i32) -> (i32, i32) {
    %c0_i32 = arith.constant 0 : i32
    %c0_i32_0 = arith.constant 0 : i32
    return %arg0, %c0_i32 : i32, i32
  }
  func.func @transform_1(%arg0: i32) -> (i32, i32) {
    %c0_i32 = arith.constant 0 : i32
    %c0_i32_0 = arith.constant 0 : i32
    %c0_i32_1 = arith.constant 0 : i32
    return %c0_i32, %c0_i32_0 : i32, i32
  }
  func.func @transform_2(%arg0: i32) -> (i32, i32) {
    %c0_i32 = arith.constant 0 : i32
    %c0_i32_0 = arith.constant 0 : i32
    return %arg0, %c0_i32 : i32, i32
  }
}

</mosaic_0001>

<llo_original>
// kernel: tpu_custom_call.1
$region0: #{tpu_custom_call.1}
  #allocation0 [shape = 'u32[]', space=smem, size = 0x4, offset = 0x4, fixed_abs, tag = 'smem constant byte address 0x4 - core index']
  #allocation1 [shape = 'u32[144,128]{1,0:T(1,128)}', space=vmem, size = 0x12000, scoped, tag = 'internal scratch']
  %s0 = inlined_call_operand.hbm [shape: f32[8,12], index: 0, kind: input, shape index: {}]
  %s1 = inlined_call_operand.hbm [shape: f32[88,128], index: 1, kind: input, shape index: {}]
  %s2 = inlined_call_operand.vmem [shape: f32[8,1], index: 2, kind: output, shape index: {}]
  %s3 = sld [smem:[#allocation0]]
  $region26: #{tpu_custom_call.1} parent=0
    _
  %s5 = ssub.s32 1, %s3
  %s6 = scalar_select 0, %s5, %s3
  $region1: #{tpu_custom_call.1} parent=0
    #allocation2 [shape = 'u8[4096]{0}', space=vmem, size = 0x1000, scoped, tag = 'input window, operand 0, single buffered']
    #allocation3 [shape = 's32[1]{0}', space=sflag, size = 0x4, scoped, tag = 'scoped memory for tpu_custom_call.1']
    #allocation4 [shape = 'u8[45056]{0}', space=vmem, size = 0xb000, scoped, tag = 'input window, operand 1, single buffered']
    #allocation5 [shape = 's32[1]{0}', space=sflag, size = 0x4, scoped, tag = 'scoped memory for tpu_custom_call.1']
    %7 = vsyncpa [#allocation3], 0
    %8 = vsyncpa [#allocation5], 0
    // Predicated region
    $region2: #{tpu_custom_call.1} parent=1 // pred_check
      _
    $region3: #{tpu_custom_call.1} parent=1 // pred_check_branch
      %10 = sbr.rel (0) target = $region5
    $region4: #{tpu_custom_call.1} parent=1 // pred_region
      %s12 = ssub.s32 128, 128
      %13 = vsyncadd [#allocation3], %s12
      %s15 = sshll.u32 [#allocation2], 4
      %s16 = int_to_ptr.vmem [resolvable:$true] %s15
      %18 = dma.hbm_to_vmem [thread:$0]  %s0, 128, %s16, [#allocation3]
    $region5: #{tpu_custom_call.1} parent=1 // pred_fallthru
      _
    // Predicated region
    $region6: #{tpu_custom_call.1} parent=1 // pred_check
      _
    $region7: #{tpu_custom_call.1} parent=1 // pred_check_branch
      %20 = sbr.rel (0) target = $region9
    $region8: #{tpu_custom_call.1} parent=1 // pred_region
      %s22 = ssub.s32 1408, 1408
      %23 = vsyncadd [#allocation5], %s22
      %s24 = sshll.u32 [#allocation4], 4
      %s25 = int_to_ptr.vmem [resolvable:$true] %s24
      %30 = dma.hbm_to_vmem [thread:$0]  %s1, 1408, %s25, [#allocation5], 128, 128, 8
    $region9: #{tpu_custom_call.1} parent=1 // pred_fallthru
      _
    // Predicated region
    $region10: #{tpu_custom_call.1} parent=1 // pred_check
      _
    $region11: #{tpu_custom_call.1} parent=1 // pred_check_branch
      %32 = sbr.rel (0) target = $region13
    $region12: #{tpu_custom_call.1} parent=1 // pred_region
      %33 = dma.done [#allocation3], 128
    $region13: #{tpu_custom_call.1} parent=1 // pred_fallthru
      _
    // Predicated region
    $region14: #{tpu_custom_call.1} parent=1 // pred_check
      _
    $region15: #{tpu_custom_call.1} parent=1 // pred_check_branch
      %35 = sbr.rel (0) target = $region17
    $region16: #{tpu_custom_call.1} parent=1 // pred_region
      %36 = dma.done [#allocation5], 1408
    $region17: #{tpu_custom_call.1} parent=1 // pred_fallthru
      _
    %v37 = vld [vmem:[#allocation2] sm:$0xff]
    %v38 = vld [vmem:[#allocation4] sm:$0xff]
    %v39 = vld [vmem:[#allocation4 + $0x8] sm:$0xf]
    %v40 = vld [vmem:[#allocation4 + $0xc] sm:$0xff]
    %v41 = vld [vmem:[#allocation4 + $0x14] sm:$0xff]
    %v42 = vld [vmem:[#allocation4 + $0x1c] sm:$0xff]
    %v43 = vld [vmem:[#allocation4 + $0x24] sm:$0xff]
    %v44 = vld [vmem:[#allocation4 + $0x2c] sm:$0xff]
    %v45 = vld [vmem:[#allocation4 + $0x34] sm:$0xff]
    %v46 = vld [vmem:[#allocation4 + $0x3c] sm:$0xff]
    %v47 = vld [vmem:[#allocation4 + $0x44] sm:$0xff]
    %v48 = vld [vmem:[#allocation4 + $0x4c] sm:$0x1]
    %v49 = vld [vmem:[#allocation4 + $0x4d] sm:$0x1]
    %v50 = vld [vmem:[#allocation4 + $0x4e] sm:$0x1]
    %v51 = vld [vmem:[#allocation4 + $0x4f] sm:$0x1]
    %v52 = vld [vmem:[#allocation4 + $0x50] sm:$0x1]
    %v53 = vlaneseq
    %v54 = vshrl.u32 %v53, 7
    %v55 = vsub.s32 0, %v54
    %v56 = vrot.slane %v48, %v55
    %vm57 = vcmask 97280
    %v59 = vsel %vm57, %v37, 0
    %vm61 = vcmask 1043456
    %v63 = vsel %vm61, %v39, 0
    %65 = vmatprep.subr.mxu0 0.0
    %66 = vmatpush1.msra.mxu0 0.0
    %67 = vmatprep.subr.mxu0 0.0
    %68 = vmatpush1.msra.mxu0 0.0
    %69 = vmatprep.subr.mxu0 0.0
    %70 = vmatpush1.msra.mxu0 0.0
    %71 = vmatprep.subr.mxu0 0.0
    %72 = vmatpush1.msra.mxu0 0.0
    %73 = vmatprep.subr.mxu0 0.0
    %74 = vmatpush1.msra.mxu0 0.0
    %75 = vmatprep.subr.mxu0 0.0
    %76 = vmatpush1.msra.mxu0 0.0
    %77 = vmatprep.subr.mxu0 0.0
    %78 = vmatpush1.msra.mxu0 0.0
    %79 = vmatprep.subr.mxu0 0.0
    %80 = vmatpush1.msra.mxu0 0.0
    %81 = vmatprep.subr.mxu0 0.0
    %82 = vmatpush1.msra.mxu0 0.0
    %83 = vmatprep.subr.mxu0 0.0
    %84 = vmatpush1.msra.mxu0 0.0
    %85 = vmatprep.subr.mxu0 0.0
    %86 = vmatpush1.msra.mxu0 0.0
    %87 = vmatprep.subr.mxu0 0.0
    %88 = vmatpush1.msra.mxu0 0.0
    %89 = vmatprep.subr.mxu0 0.0
    %90 = vmatpush1.msra.mxu0 0.0
    %91 = vmatprep.subr.mxu0 0.0
    %92 = vmatpush1.msra.mxu0 0.0
    %93 = vmatprep.subr.mxu0 0.0
    %94 = vmatpush1.msra.mxu0 %v63
    %95 = vmatprep.subr.mxu0 0.0
    %96 = vmatpush1.msra.mxu0 %v38
    %97 = vmatprep.subr.mxu0 0.0
    %98 = vmatpush2.msra.mxu0 0.0
    %99 = vmatprep.subr.mxu0 0.0
    %100 = vmatpush2.msra.mxu0 0.0
    %101 = vmatprep.subr.mxu0 0.0
    %102 = vmatpush2.msra.mxu0 0.0
    %103 = vmatprep.subr.mxu0 0.0
    %104 = vmatpush2.msra.mxu0 0.0
    %105 = vmatprep.subr.mxu0 0.0
    %106 = vmatpush2.msra.mxu0 0.0
    %107 = vmatprep.subr.mxu0 0.0
    %108 = vmatpush2.msra.mxu0 0.0
    %109 = vmatprep.subr.mxu0 0.0
    %110 = vmatpush2.msra.mxu0 0.0
    %111 = vmatprep.subr.mxu0 0.0
    %112 = vmatpush2.msra.mxu0 0.0
    %113 = vmatprep.subr.mxu0 0.0
    %114 = vmatpush2.msra.mxu0 0.0
    %115 = vmatprep.subr.mxu0 0.0
    %116 = vmatpush2.msra.mxu0 0.0
    %117 = vmatprep.subr.mxu0 0.0
    %118 = vmatpush2.msra.mxu0 0.0
    %119 = vmatprep.subr.mxu0 0.0
    %120 = vmatpush2.msra.mxu0 0.0
    %121 = vmatprep.subr.mxu0 0.0
    %122 = vmatpush2.msra.mxu0 0.0
    %123 = vmatprep.subr.mxu0 0.0
    %124 = vmatpush2.msra.mxu0 0.0
    %125 = vmatprep.subr.mxu0 0.0
    %126 = vmatpush2.msra.mxu0 0.0
    %127 = vmatprep.subr.mxu0 0.0
    %128 = vmatpush2.msra.mxu0 0.0
    %129 = vmatprep.mubr.f32.mxu0 0.0
    %130 = vmatmul.mubr.f32.gmra.mxu0 %v59
    %v131 = vpop.f32.mrf.mxu0
    %v132 = vadd.f32 %v56, %v131
    %v133 = vpop.f32.mrf.mxu0
    %134 = vdwg.mxu0
    %v135 = vmul.f32 %v132, 0.01
    %v136 = vmax.f32 %v132, %v135
    %v137 = vlaneseq
    %v138 = vshrl.u32 %v137, 7
    %v139 = vsub.s32 0, %v138
    %v140 = vrot.slane %v49, %v139
    %vm141 = vcmask 523264
    %v143 = vsel %vm141, %v136, 0
    %145 = vmatprep.subr.mxu0 0.0
    %146 = vmatpush1.msra.mxu0 0.0
    %147 = vmatprep.subr.mxu0 0.0
    %148 = vmatpush1.msra.mxu0 0.0
    %149 = vmatprep.subr.mxu0 0.0
    %150 = vmatpush1.msra.mxu0 0.0
    %151 = vmatprep.subr.mxu0 0.0
    %152 = vmatpush1.msra.mxu0 0.0
    %153 = vmatprep.subr.mxu0 0.0
    %154 = vmatpush1.msra.mxu0 0.0
    %155 = vmatprep.subr.mxu0 0.0
    %156 = vmatpush1.msra.mxu0 0.0
    %157 = vmatprep.subr.mxu0 0.0
    %158 = vmatpush1.msra.mxu0 0.0
    %159 = vmatprep.subr.mxu0 0.0
    %160 = vmatpush1.msra.mxu0 0.0
    %161 = vmatprep.subr.mxu0 0.0
    %162 = vmatpush1.msra.mxu0 %v47
    %163 = vmatprep.subr.mxu0 0.0
    %164 = vmatpush1.msra.mxu0 %v46
    %165 = vmatprep.subr.mxu0 0.0
    %166 = vmatpush1.msra.mxu0 %v45
    %167 = vmatprep.subr.mxu0 0.0
    %168 = vmatpush1.msra.mxu0 %v44
    %169 = vmatprep.subr.mxu0 0.0
    %170 = vmatpush1.msra.mxu0 %v43
    %171 = vmatprep.subr.mxu0 0.0
    %172 = vmatpush1.msra.mxu0 %v42
    %173 = vmatprep.subr.mxu0 0.0
    %174 = vmatpush1.msra.mxu0 %v41
    %175 = vmatprep.subr.mxu0 0.0
    %176 = vmatpush1.msra.mxu0 %v40
    %177 = vmatprep.subr.mxu0 0.0
    %178 = vmatpush2.msra.mxu0 0.0
    %179 = vmatprep.subr.mxu0 0.0
    %180 = vmatpush2.msra.mxu0 0.0
    %181 = vmatprep.subr.mxu0 0.0
    %182 = vmatpush2.msra.mxu0 0.0
    %183 = vmatprep.subr.mxu0 0.0
    %184 = vmatpush2.msra.mxu0 0.0
    %185 = vmatprep.subr.mxu0 0.0
    %186 = vmatpush2.msra.mxu0 0.0
    %187 = vmatprep.subr.mxu0 0.0
    %188 = vmatpush2.msra.mxu0 0.0
    %189 = vmatprep.subr.mxu0 0.0
    %190 = vmatpush2.msra.mxu0 0.0
    %191 = vmatprep.subr.mxu0 0.0
    %192 = vmatpush2.msra.mxu0 0.0
    %193 = vmatprep.subr.mxu0 0.0
    %194 = vmatpush2.msra.mxu0 0.0
    %195 = vmatprep.subr.mxu0 0.0
    %196 = vmatpush2.msra.mxu0 0.0
    %197 = vmatprep.subr.mxu0 0.0
    %198 = vmatpush2.msra.mxu0 0.0
    %199 = vmatprep.subr.mxu0 0.0
    %200 = vmatpush2.msra.mxu0 0.0
    %201 = vmatprep.subr.mxu0 0.0
    %202 = vmatpush2.msra.mxu0 0.0
    %203 = vmatprep.subr.mxu0 0.0
    %204 = vmatpush2.msra.mxu0 0.0
    %205 = vmatprep.subr.mxu0 0.0
    %206 = vmatpush2.msra.mxu0 0.0
    %207 = vmatprep.subr.mxu0 0.0
    %208 = vmatpush2.msra.mxu0 0.0
    %209 = vmatprep.mubr.f32.mxu0 0.0
    %210 = vmatmul.mubr.f32.gmra.mxu0 %v143
    %v211 = vpop.f32.mrf.mxu0
    %v212 = vadd.f32 %v140, %v211
    %v213 = vpop.f32.mrf.mxu0
    %214 = vdwg.mxu0
    %v215 = vmul.f32 %v212, 0.01
    %v216 = vmax.f32 %v212, %v215
    %v217 = vlaneseq
    %v218 = vshrl.u32 %v217, 7
    %v219 = vsub.s32 0, %v218
    %v220 = vrot.slane %v50, %v219
    %v221 = vmul.f32 %v216, %v220
    %v222 = vlaneseq
    %v223 = vshrl.u32 %v222, 7
    %v224 = vsub.s32 0, %v223
    %v225 = vrot.slane %v51, %v224
    %227 = vrot.lane.b32.xlu0 %v225, 64
    %v228 = vpop.permute.xlu0 %227
    %v230 = vmul.f32 %v136, %v228
    %232 = vrot.lane.b32.xlu0 %v230, 64
    %v233 = vpop.permute.xlu0 %232
    %v235 = vadd.f32 %v221, %v233
    %vm236 = vcmask 261120
    %v237 = vsel %vm236, %v235, 0.0
    %238 = vadd.xlane.f32.xlu0 %v237
    %v239 = vpop.xlane.xlu0 %238
    %v240 = vlaneseq
    %v241 = vshrl.u32 %v240, 7
    %v242 = vsub.s32 0, %v241
    %v243 = vrot.slane %v52, %v242
    %v244 = vadd.f32 %v239, %v243
    %vm245 = vcmask 7168
    %246 = vst.msk [vmem:[%s2] sm:$0xff] %vm245, %v244
    // Predicated region
    $region18: #{tpu_custom_call.1} parent=1 // pred_check
      _
    $region19: #{tpu_custom_call.1} parent=1 // pred_check_branch
      %248 = sbr.rel (0) target = $region21
    $region20: #{tpu_custom_call.1} parent=1 // pred_region
      _
    $region21: #{tpu_custom_call.1} parent=1 // pred_fallthru
      _
    // Predicated region
    $region22: #{tpu_custom_call.1} parent=1 // pred_check
      _
    $region23: #{tpu_custom_call.1} parent=1 // pred_check_branch
      %250 = sbr.rel (0) target = $region25
    $region24: #{tpu_custom_call.1} parent=1 // pred_region
      _
    $region25: #{tpu_custom_call.1} parent=1 // pred_fallthru
      _
    %251 = vsyncpa [#allocation3], 1
    %252 = vsyncpa [#allocation5], 1

</llo_original>
